<compile_context>
chip_gen: v6e
topology: v6e:2x2x1
jax: 0.10.0
libtpu: 0.0.40
codegen_flags: <defaults>
</compile_context>

<pallas_src>
import jax
import jax.numpy as jnp
from jax.experimental import pallas as pl
from jax.experimental.pallas import tpu as pltpu

LANES = 128
_R_TILE_MAX = 2048   # sublane-rows per tile -> 262,144 batch elems/tile
                     # x tile 3*2048*128*4 = 3 MiB, out tile 1 MiB;
                     # double-buffered ~8 MiB << 32 MiB scoped VMEM (v7x-safe).


def _linear_kernel(w_ref, b_ref, x_ref, o_ref):
    # w_ref: SMEM (3,)  b_ref: SMEM (1,)
    # x_ref: VMEM (3, R_TILE, 128)  o_ref: VMEM (R_TILE, 128)
    x = x_ref[...].astype(jnp.float32)                       # full-plane loads
    y = w_ref[0] * x[0] + w_ref[1] * x[1] + w_ref[2] * x[2] + b_ref[0]
    o_ref[...] = y.astype(o_ref.dtype)


def _choose_r_tile(n_rows: int) -> int:
    """Pick the sublane-row tile: multiple of 8 (or full extent), capped for
    VMEM, and split into >=2 tiles when possible so v7x megacore shards."""
    if n_rows <= 8:
        return n_rows                       # block dim == full array dim
    half = -(-n_rows // 2)                  # ceil(R/2)
    half = ((half + 7) // 8) * 8            # round up to sublane multiple
    return min(_R_TILE_MAX, half)


def _pallas_linear_fm(x_fm, w, b):
    """x_fm: (3, R, 128) feature-major, 128-aligned. w: (3,). b: (1,).
    Returns (R, 128) in x_fm.dtype."""
    f_in, n_rows, lanes = x_fm.shape
    r_tile = _choose_r_tile(n_rows)
    n_tiles = pl.cdiv(n_rows, r_tile)
    return pl.pallas_call(
        _linear_kernel,
        out_shape=jax.ShapeDtypeStruct((n_rows, lanes), x_fm.dtype),
        grid=(n_tiles,),
        in_specs=[
            pl.BlockSpec(memory_space=pltpu.MemorySpace.SMEM),   # weight (3,)
            pl.BlockSpec(memory_space=pltpu.MemorySpace.SMEM),   # bias   (1,)
            pl.BlockSpec((f_in, r_tile, lanes), lambda i: (0, i, 0)),
        ],
        out_specs=pl.BlockSpec((r_tile, lanes), lambda i: (i, 0)),
        compiler_params=pltpu.CompilerParams(
            dimension_semantics=("parallel",),          # megacore on v7x
            vmem_limit_bytes=32 * 1024 * 1024,
        ),
    )(w, b, x_fm)


def modelo_gasolina_forward(x, weight, bias, *, min_pallas_batch=32768):
    """ModeloGasolina.forward: nn.Linear(3, 1).

    x: (B, 3); weight: (1, 3) (PyTorch layout); bias: (1,). Returns (B, 1).
    For small batches the plain XLA GEMV is already at roofline, so the Pallas
    path is only taken for B >= min_pallas_batch (set 0 to force it).
    """
    B, f_in = x.shape
    f_out = weight.shape[0]

    w = weight.reshape(f_in).astype(jnp.float32)
    b = bias.reshape(f_out).astype(jnp.float32)

    if B < min_pallas_batch:
        return x @ w.astype(x.dtype)[:, None] + b.astype(x.dtype)

    # Layout plumbing: one fused transpose(+pad) to feature-major (3, R, 128).
    # (Ideally x arrives feature-major upstream and this is a free reshape.)
    b_pad = pl.cdiv(B, LANES) * LANES
    x_fm = x.T                                           # (3, B)
    if b_pad != B:
        x_fm = jnp.pad(x_fm, ((0, 0), (0, b_pad - B)))
    x_fm = x_fm.reshape(f_in, b_pad // LANES, LANES)

    y = _pallas_linear_fm(x_fm, w, b)                    # (R, 128)
    return y.reshape(b_pad, 1)[:B]


if __name__ == "__main__":
    key = jax.random.PRNGKey(0)
    kx, kw, kb = jax.random.split(key, 3)

    F_in, F_out = 3, 1
    bound = 1.0 / jnp.sqrt(jnp.float32(F_in))
    weight = jax.random.uniform(kw, (F_out, F_in), minval=-bound, maxval=bound,
                                dtype=jnp.float32)
    bias = jax.random.uniform(kb, (F_out,), minval=-bound, maxval=bound,
                              dtype=jnp.float32)

    ok = True
    # Force the Pallas path at small shapes: lane-aligned, ragged, multi-tile.
    for B in (256, 300, 2048):
        x = jax.random.normal(jax.random.fold_in(kx, B), (B, F_in),
                              dtype=jnp.float32)
        y = modelo_gasolina_forward(x, weight, bias, min_pallas_batch=0)
        jax.block_until_ready(y)
        y_ref = x @ weight.T + bias
        ok = ok and y.shape == (B, F_out)
        ok = ok and bool(jnp.allclose(y, y_ref, atol=1e-5, rtol=1e-5))

    # Small-batch dispatch path (plain XLA) for completeness.
    x_small = jax.random.normal(kx, (8, F_in), dtype=jnp.float32)
    y_small = modelo_gasolina_forward(x_small, weight, bias)
    jax.block_until_ready(y_small)
    ok = ok and bool(jnp.allclose(y_small, x_small @ weight.T + bias,
                                  atol=1e-5, rtol=1e-5))

    assert ok
    print("KERNEL_OK")
</pallas_src>

<mosaic_0001>
module attributes {stable_mosaic.version = 11 : i64} {
  func.func @_linear_kernel(%arg0: i32, %arg1: memref<3xf32, #tpu.memory_space<smem>>, %arg2: memref<1xf32, #tpu.memory_space<smem>>, %arg3: memref<3x2x128xf32, #tpu.memory_space<vmem>>, %arg4: memref<2x128xf32, #tpu.memory_space<vmem>>) attributes {dimension_semantics = [#tpu.dimension_semantics<parallel>], iteration_bounds = array<i64: 1>, scalar_prefetch = 0 : i64, scratch_operands = 0 : i64, tpu.core_type = #tpu.core_type<tc>, window_params = [{transform_indices = @transform_0, window_bounds = array<i64: 3>}, {transform_indices = @transform_1, window_bounds = array<i64: 1>}, {transform_indices = @transform_2, window_bounds = array<i64: 3, 2, 128>}, {transform_indices = @transform_3, window_bounds = array<i64: 2, 128>}]} {
    %c0 = arith.constant 0 : index
    %c0_0 = arith.constant 0 : index
    %c0_1 = arith.constant 0 : index
    %0 = vector.load %arg3[%c0, %c0_0, %c0_1] : memref<3x2x128xf32, #tpu.memory_space<vmem>>, vector<3x2x128xf32>
    %c0_2 = arith.constant 0 : index
    %1 = memref.load %arg1[%c0_2] : memref<3xf32, #tpu.memory_space<smem>>
    %2 = vector.extract_strided_slice %0 {offsets = [0, 0, 0], sizes = [1, 2, 128], strides = [1, 1, 1]} : vector<3x2x128xf32> to vector<1x2x128xf32>
    %3 = vector.shape_cast %2 : vector<1x2x128xf32> to vector<2x128xf32>
    %4 = vector.broadcast %1 : f32 to vector<2x128xf32>
    %5 = arith.mulf %4, %3 : vector<2x128xf32>
    %c1 = arith.constant 1 : index
    %6 = memref.load %arg1[%c1] : memref<3xf32, #tpu.memory_space<smem>>
    %7 = vector.extract_strided_slice %0 {offsets = [1, 0, 0], sizes = [1, 2, 128], strides = [1, 1, 1]} : vector<3x2x128xf32> to vector<1x2x128xf32>
    %8 = vector.shape_cast %7 : vector<1x2x128xf32> to vector<2x128xf32>
    %9 = vector.broadcast %6 : f32 to vector<2x128xf32>
    %10 = arith.mulf %9, %8 : vector<2x128xf32>
    %11 = arith.addf %5, %10 : vector<2x128xf32>
    %c2 = arith.constant 2 : index
    %12 = memref.load %arg1[%c2] : memref<3xf32, #tpu.memory_space<smem>>
    %13 = vector.extract_strided_slice %0 {offsets = [2, 0, 0], sizes = [1, 2, 128], strides = [1, 1, 1]} : vector<3x2x128xf32> to vector<1x2x128xf32>
    %14 = vector.shape_cast %13 : vector<1x2x128xf32> to vector<2x128xf32>
    %15 = vector.broadcast %12 : f32 to vector<2x128xf32>
    %16 = arith.mulf %15, %14 : vector<2x128xf32>
    %17 = arith.addf %11, %16 : vector<2x128xf32>
    %c0_3 = arith.constant 0 : index
    %18 = memref.load %arg2[%c0_3] : memref<1xf32, #tpu.memory_space<smem>>
    %19 = vector.broadcast %18 : f32 to vector<2x128xf32>
    %20 = arith.addf %17, %19 : vector<2x128xf32>
    %c0_4 = arith.constant 0 : index
    %c0_5 = arith.constant 0 : index
    %21 = vector.load %arg4[%c0_4, %c0_5] : memref<2x128xf32, #tpu.memory_space<vmem>>, vector<2x128xf32>
    tpu.vector_store %arg4[%c0_4, %c0_5], %20 {strides = array<i32>} : memref<2x128xf32, #tpu.memory_space<vmem>>, vector<2x128xf32>,
    return
  }
  func.func @transform_0(%arg0: i32) -> i32 {
    %c0_i32 = arith.constant 0 : i32
    %c0_i32_0 = arith.constant 0 : i32
    return %c0_i32 : i32
  }
  func.func @transform_1(%arg0: i32) -> i32 {
    %c0_i32 = arith.constant 0 : i32
    %c0_i32_0 = arith.constant 0 : i32
    return %c0_i32 : i32
  }
  func.func @transform_2(%arg0: i32) -> (i32, i32, i32) {
    %c0_i32 = arith.constant 0 : i32
    %c0_i32_0 = arith.constant 0 : i32
    %c0_i32_1 = arith.constant 0 : i32
    return %c0_i32, %arg0, %c0_i32_0 : i32, i32, i32
  }
  func.func @transform_3(%arg0: i32) -> (i32, i32) {
    %c0_i32 = arith.constant 0 : i32
    %c0_i32_0 = arith.constant 0 : i32
    return %arg0, %c0_i32 : i32, i32
  }
}

</mosaic_0001>

<llo_original>
// kernel: tpu_custom_call.1
$region0: #{tpu_custom_call.1}
  #allocation0 [shape = 'u32[]', space=smem, size = 0x4, offset = 0x4, fixed_abs, tag = 'smem constant byte address 0x4 - core index']
  #allocation1 [shape = 'u32[144,128]{1,0:T(1,128)}', space=vmem, size = 0x12000, scoped, tag = 'internal scratch']
  #allocation2 [shape = 'f32[1]{0:T(128)S(6)}', space=smem, size = 0x200, scoped, tag = 'scoped memory for tpu_custom_call.1']
  %s0 = inlined_call_operand.vmem [shape: f32[3], index: 0, kind: input, shape index: {}]
  %s1 = inlined_call_operand.<no memory space> [shape: f32[1], index: 1, kind: input, shape index: {}]
  %s2 = inlined_call_operand.hbm [shape: f32[3,2,128], index: 2, kind: input, shape index: {}]
  %s3 = inlined_call_operand.hbm [shape: f32[2,128], index: 3, kind: output, shape index: {}]
  %s4 = sld [smem:[#allocation0]]
  $region30: #{tpu_custom_call.1} parent=0
    _
  %s6 = ssub.s32 1, %s4
  %s7 = scalar_select 0, %s6, %s4
  %8 = sst [smem:[#allocation2]] %s1
  $region1: #{tpu_custom_call.1} parent=0
    #allocation3 [shape = 'u8[512]{0}', space=smem, size = 0x200, scoped, tag = 'input window, operand 0, single buffered']
    #allocation4 [shape = 's32[1]{0}', space=sflag, size = 0x4, scoped, tag = 'scoped memory for tpu_custom_call.1']
    #allocation5 [shape = 's32[1]{0}', space=sflag, size = 0x4, scoped, tag = 'scoped memory for tpu_custom_call.1']
    #allocation6 [shape = 's32[1]{0}', space=sflag, size = 0x4, scoped, tag = 'scoped memory for tpu_custom_call.1']
    #allocation7 [shape = 'u8[3072]{0}', space=vmem, size = 0xc00, scoped, tag = 'input window, operand 2, single buffered']
    #allocation8 [shape = 'u8[1024]{0}', space=vmem, size = 0x400, scoped, tag = 'output window, operand 0, single buffered']
    %9 = vsyncpa [#allocation6], 0
    %10 = vsyncpa [#allocation4], 0
    %11 = vsyncpa [#allocation5], 0
    // Predicated region
    $region2: #{tpu_custom_call.1} parent=1 // pred_check
      _
    $region3: #{tpu_custom_call.1} parent=1 // pred_check_branch
      %13 = sbr.rel (0) target = $region5
    $region4: #{tpu_custom_call.1} parent=1 // pred_region
      %s15 = ssub.s32 16, 16
      %16 = vsyncadd [#allocation6], %s15
      %s18 = sshll.u32 %s0, 4
      %s19 = int_to_ptr.vmem [resolvable:$true] %s18
      %21 = dma.vmem_to_smem %s19, 16, [#allocation3], [#allocation6]
    $region5: #{tpu_custom_call.1} parent=1 // pred_fallthru
      _
    // Predicated region
    $region6: #{tpu_custom_call.1} parent=1 // pred_check
      _
    $region7: #{tpu_custom_call.1} parent=1 // pred_check_branch
      %23 = sbr.rel (0) target = $region9
    $region8: #{tpu_custom_call.1} parent=1 // pred_region
      _
    $region9: #{tpu_custom_call.1} parent=1 // pred_fallthru
      _
    // Predicated region
    $region10: #{tpu_custom_call.1} parent=1 // pred_check
      _
    $region11: #{tpu_custom_call.1} parent=1 // pred_check_branch
      %25 = sbr.rel (0) target = $region13
    $region12: #{tpu_custom_call.1} parent=1 // pred_region
      %s27 = ssub.s32 96, 96
      %28 = vsyncadd [#allocation4], %s27
      %s29 = sshll.u32 [#allocation7], 4
      %s30 = int_to_ptr.vmem [resolvable:$true] %s29
      %35 = dma.hbm_to_vmem [thread:$0]  %s2, 96, %s30, [#allocation4], 32, 32, 2
    $region13: #{tpu_custom_call.1} parent=1 // pred_fallthru
      _
    // Predicated region
    $region14: #{tpu_custom_call.1} parent=1 // pred_check
      _
    $region15: #{tpu_custom_call.1} parent=1 // pred_check_branch
      %37 = sbr.rel (0) target = $region17
    $region16: #{tpu_custom_call.1} parent=1 // pred_region
      %38 = dma.done [#allocation6], 16
    $region17: #{tpu_custom_call.1} parent=1 // pred_fallthru
      _
    // Predicated region
    $region18: #{tpu_custom_call.1} parent=1 // pred_check
      _
    $region19: #{tpu_custom_call.1} parent=1 // pred_check_branch
      %40 = sbr.rel (0) target = $region21
    $region20: #{tpu_custom_call.1} parent=1 // pred_region
      %41 = dma.done [#allocation4], 96
    $region21: #{tpu_custom_call.1} parent=1 // pred_fallthru
      _
    %42 = sfence
    %v43 = vld [vmem:[#allocation7] sm:$0x3]
    %v44 = vld [vmem:[#allocation7 + $0x2] sm:$0x3]
    %v45 = vld [vmem:[#allocation7 + $0x4] sm:$0x3]
    %s46 = sld [smem:[#allocation3]]
    %v47 = vstv %s46
    %v48 = vmul.f32 %v47, %v43
    %s49 = sld [smem:[#allocation3 + $0x1]]
    %v50 = vstv %s49
    %v51 = vmul.f32 %v50, %v44
    %v52 = vadd.f32 %v48, %v51
    %s53 = sld [smem:[#allocation3 + $0x2]]
    %v54 = vstv %s53
    %v55 = vmul.f32 %v54, %v45
    %v56 = vadd.f32 %v52, %v55
    %s57 = sld [smem:[#allocation2]]
    %v58 = vstv %s57
    %v59 = vadd.f32 %v56, %v58
    %60 = vst [vmem:[#allocation8] sm:$0x3] %v59
    // Predicated region
    $region22: #{tpu_custom_call.1} parent=1 // pred_check
      _
    $region23: #{tpu_custom_call.1} parent=1 // pred_check_branch
      %62 = sbr.rel (0) target = $region25
    $region24: #{tpu_custom_call.1} parent=1 // pred_region
      %s64 = ssub.s32 32, 32
      %65 = vsyncadd [#allocation5], %s64
      %s67 = sshll.u32 [#allocation8], 4
      %s68 = int_to_ptr.vmem [resolvable:$true] %s67
      %70 = dma.vmem_to_hbm [thread:$0]  %s68, 32, %s3, [#allocation5]
    $region25: #{tpu_custom_call.1} parent=1 // pred_fallthru
      _
    // Predicated region
    $region26: #{tpu_custom_call.1} parent=1 // pred_check
      _
    $region27: #{tpu_custom_call.1} parent=1 // pred_check_branch
      %72 = sbr.rel (0) target = $region29
    $region28: #{tpu_custom_call.1} parent=1 // pred_region
      %73 = dma.done [#allocation5], 32
    $region29: #{tpu_custom_call.1} parent=1 // pred_fallthru
      _
    %74 = vsyncpa [#allocation4], 1
    %75 = vsyncpa [#allocation5], 1
    %76 = vsyncpa [#allocation6], 1

</llo_original>
